<compile_context>
chip_gen: v6e
topology: v6e:2x2x1
jax: 0.10.0
libtpu: 0.0.40
codegen_flags: <defaults>
</compile_context>

<pallas_src>
import jax
import jax.numpy as jnp
from jax.experimental import pallas as pl
from jax.experimental.pallas import tpu as pltpu


# ----------------------------- model dims ----------------------------------
B = 8      # batch
D = 32     # pretrained_model.input_output_dim (input features)
H = 64     # encoder hidden width
L = 16     # latent dim (encoder emits 2*L = mu ++ log_var)
F = 32     # ffnn hidden width
O = 4      # ffnn_model.output_dim

P = 128    # lane width: every in-kernel tensor is padded to 128 lanes

# ---- packed weight slab row offsets (all multiples of 8 -> aligned slices) --
W1_R = 0             # [P, P]  w1      (real data in [:D, :H])
B1_R = W1_R + P      # 128     b1      (row B1_R, lanes [:H])
W2_R = B1_R + 8      # 136     w2      (real [:H, :L]=mu cols, [:H, L:2L]=log_var cols)
B2_R = W2_R + P      # 264     b2      (lanes [:L]=mu bias, [L:2L]=log_var bias)
W3_R = B2_R + 8      # 272     w3      (real [:L, :F])
B3_R = W3_R + P      # 400     b3
W4_R = B3_R + 8      # 408     w4      (real [:F, :O])
B4_R = W4_R + P      # 536     b4
SLAB_ROWS = B4_R + 8  # 544 rows x 128 lanes x 4B ~= 272 KB, VMEM-resident


# ----------------------------- Pallas kernel --------------------------------
def pretrained_ffnn_kernel(xe_ref, w_ref, out_ref):
    # xe: (bt, 128) with x in lanes [:D], eps in lanes [D:D+L], zeros elsewhere
    xe = xe_ref[...]
    # eps lands in lanes [:L]; wrapped x values land in high lanes (finite,
    # later killed by w3's zero rows).  Positive shift == roll by -D.
    eps = pltpu.roll(xe, P - D, axis=1)

    # ---- encoder: Linear -> ReLU -> Linear (fused mu|log_var dot) -----------
    # w1 rows [D:D+L] are zero, so the eps lanes do not perturb x @ w1.
    h = jnp.dot(xe, w_ref[W1_R:W1_R + P, :],
                preferred_element_type=jnp.float32) + w_ref[B1_R:B1_R + 1, :]
    h = jnp.maximum(h, 0.0)                                  # lanes [H:] stay 0

    enc = jnp.dot(h, w_ref[W2_R:W2_R + P, :],
                  preferred_element_type=jnp.float32) + w_ref[B2_R:B2_R + 1, :]
    # enc lanes: [:L]=mu, [L:2L]=log_var, [2L:]=0
    log_var = pltpu.roll(enc, P - L, axis=1)                 # lanes [:L]=log_var

    # ---- reparameterize: Z = mu + eps * exp(0.5*log_var) --------------------
    # Exact in lanes [:L]; all other lanes hold finite garbage that w3's zero
    # rows [L:] eliminate in the next dot.
    z = enc + eps * jnp.exp(0.5 * log_var)

    # ---- ffnn: Linear -> ReLU -> Linear (sigmoid applied in wrapper) --------
    f = jnp.dot(z, w_ref[W3_R:W3_R + P, :],
                preferred_element_type=jnp.float32) + w_ref[B3_R:B3_R + 1, :]
    f = jnp.maximum(f, 0.0)

    out_ref[...] = jnp.dot(f, w_ref[W4_R:W4_R + P, :],
                           preferred_element_type=jnp.float32) + w_ref[B4_R:B4_R + 1, :]


# ----------------------------- weight packing --------------------------------
def pack_params(params):
    """Pack all weights/biases into one lane-padded [SLAB_ROWS, 128] slab.

    Rows/cols outside the real extents MUST stay exactly zero: that is what
    makes the x|eps packing, the fused mu|log_var dot, and the padded lanes
    mathematically exact.
    """
    slab = jnp.zeros((SLAB_ROWS, P), jnp.float32)
    slab = slab.at[W1_R:W1_R + D, :H].set(params["w1"])
    slab = slab.at[B1_R, :H].set(params["b1"].reshape(H))
    slab = slab.at[W2_R:W2_R + H, :2 * L].set(params["w2"])   # [mu cols | log_var cols]
    slab = slab.at[B2_R, :2 * L].set(params["b2"].reshape(2 * L))
    slab = slab.at[W3_R:W3_R + L, :F].set(params["w3"])
    slab = slab.at[B3_R, :F].set(params["b3"].reshape(F))
    slab = slab.at[W4_R:W4_R + F, :O].set(params["w4"])
    slab = slab.at[B4_R, :O].set(params["b4"].reshape(O))
    return slab


# ----------------------------- wrapper ---------------------------------------
def pretrained_ffnn_forward(x, slab, eps, *, block_b=1024):
    """Returns (y, last_layer_presigmoid), matching PreTrainedFFNN.forward."""
    b_in = x.shape[0]

    # Batch tile: multiple of 8 sublanes, capped both by block_b and by
    # round8(ceil(b/2)) so that large batches always produce >= 2 grid blocks
    # (v7x: both TensorCores get work via the "parallel" axis).
    half8 = max(8, -(-(-(-b_in // 2)) // 8) * 8)   # round8(ceil(b_in / 2))
    bt = max(8, min(block_b, half8))
    n_blocks = -(-b_in // bt)
    b_pad = n_blocks * bt

    # Single packed & padded input stream: x in lanes [:D], eps in [D:D+L].
    xe = jnp.concatenate([x.astype(jnp.float32), eps.astype(jnp.float32)], axis=1)
    xe = jnp.pad(xe, ((0, b_pad - b_in), (0, P - (D + L))))

    presig_slab = pl.pallas_call(
        pretrained_ffnn_kernel,
        out_shape=jax.ShapeDtypeStruct((b_pad, P), jnp.float32),
        grid_spec=pltpu.PrefetchScalarGridSpec(
            num_scalar_prefetch=0,
            grid=(n_blocks,),
            in_specs=[
                pl.BlockSpec((bt, P), lambda i: (i, 0)),          # x|eps (streamed)
                pl.BlockSpec((SLAB_ROWS, P), lambda i: (0, 0)),   # weights (resident)
            ],
            out_specs=pl.BlockSpec((bt, P), lambda i: (i, 0)),    # presigmoid plane
        ),
        compiler_params=pltpu.CompilerParams(
            dimension_semantics=("parallel",),   # shards batch over v7x's 2 TCs
        ),
    )(xe, slab)

    presigmoid = presig_slab[:b_in, :O]
    y = jax.nn.sigmoid(presigmoid)               # tiny [b, O] op in the wrapper
    return y, presigmoid


# ----------------------------- param init -----------------------------------
def init_params(key):
    ks = jax.random.split(key, 8)
    scale = 0.1
    return {
        "w1": scale * jax.random.normal(ks[0], (D, H), jnp.float32),
        "b1": scale * jax.random.normal(ks[1], (1, H), jnp.float32),
        "w2": scale * jax.random.normal(ks[2], (H, 2 * L), jnp.float32),
        "b2": scale * jax.random.normal(ks[3], (1, 2 * L), jnp.float32),
        "w3": scale * jax.random.normal(ks[4], (L, F), jnp.float32),
        "b3": scale * jax.random.normal(ks[5], (1, F), jnp.float32),
        "w4": scale * jax.random.normal(ks[6], (F, O), jnp.float32),
        "b4": scale * jax.random.normal(ks[7], (1, O), jnp.float32),
    }


def reference_forward(x, params, eps):
    """Pure-JAX reference for the same forward pass."""
    h = jnp.maximum(x @ params["w1"] + params["b1"], 0.0)
    enc = h @ params["w2"] + params["b2"]
    mu, log_var = enc[:, :L], enc[:, L:]
    z = mu + eps * jnp.exp(0.5 * log_var)
    f = jnp.maximum(z @ params["w3"] + params["b3"], 0.0)
    pres = f @ params["w4"] + params["b4"]
    return jax.nn.sigmoid(pres), pres


# ----------------------------- main ------------------------------------------
if __name__ == "__main__":
    key = jax.random.PRNGKey(0)
    k_param, k_x, k_eps = jax.random.split(key, 3)

    params = init_params(k_param)
    slab = pack_params(params)
    x = jax.random.normal(k_x, (B, D), jnp.float32)
    # Deterministic reparameterization noise (torch.randn_like equivalent).
    eps = jax.random.normal(k_eps, (B, L), jnp.float32)

    y, presigmoid = pretrained_ffnn_forward(x, slab, eps)
    y = jax.block_until_ready(y)
    presigmoid = jax.block_until_ready(presigmoid)

    y_ref, pres_ref = reference_forward(x, params, eps)
    assert jnp.allclose(y, y_ref, atol=1e-5, rtol=1e-5)
    assert jnp.allclose(presigmoid, pres_ref, atol=1e-5, rtol=1e-5)

    print("KERNEL_OK")
</pallas_src>

<mosaic_0001>
module attributes {stable_mosaic.version = 11 : i64} {
  func.func @pretrained_ffnn_kernel(%arg0: i32, %arg1: memref<8x128xf32, #tpu.memory_space<vmem>>, %arg2: memref<544x128xf32, #tpu.memory_space<vmem>>, %arg3: memref<8x128xf32, #tpu.memory_space<vmem>>) attributes {dimension_semantics = [#tpu.dimension_semantics<parallel>], iteration_bounds = array<i64: 1>, scalar_prefetch = 0 : i64, scratch_operands = 0 : i64, tpu.core_type = #tpu.core_type<tc>, window_params = [{transform_indices = @transform_0, window_bounds = array<i64: 8, 128>}, {pipeline_mode = #tpu.pipeline_mode<synchronous>, transform_indices = @transform_1, window_bounds = array<i64: 544, 128>}, {transform_indices = @transform_2, window_bounds = array<i64: 8, 128>}]} {
    %c0 = arith.constant 0 : index
    %c0_0 = arith.constant 0 : index
    %0 = vector.load %arg1[%c0, %c0_0] : memref<8x128xf32, #tpu.memory_space<vmem>>, vector<8x128xf32>
    %c96_i32 = arith.constant 96 : i32
    %1 = tpu.dynamic_rotate %0 by %c96_i32 dim 1 : vector<8x128xf32>, i32 -> vector<8x128xf32>
    %c0_1 = arith.constant 0 : index
    %c0_2 = arith.constant 0 : index
    %2 = vector.load %arg2[%c0_1, %c0_2] : memref<544x128xf32, #tpu.memory_space<vmem>>, vector<128x128xf32>
    %cst = arith.constant dense<0.000000e+00> : vector<8x128xf32>
    %3 = tpu.matmul %0, %2, %cst {dimension_numbers = #tpu.dot_dimension_numbers<[1], [0], [0], [1], [0, 0, 1, 1], [], []>} : vector<8x128xf32>, vector<128x128xf32>, vector<8x128xf32> -> vector<8x128xf32>
    %c128 = arith.constant 128 : index
    %c0_3 = arith.constant 0 : index
    %4 = vector.load %arg2[%c128, %c0_3] : memref<544x128xf32, #tpu.memory_space<vmem>>, vector<1x128xf32>
    %5 = vector.broadcast %4 : vector<1x128xf32> to vector<8x128xf32>
    %6 = arith.addf %3, %5 : vector<8x128xf32>
    %cst_4 = arith.constant 0.000000e+00 : f32
    %7 = vector.broadcast %cst_4 : f32 to vector<8x128xf32>
    %8 = arith.maximumf %6, %7 : vector<8x128xf32>
    %c136 = arith.constant 136 : index
    %c0_5 = arith.constant 0 : index
    %9 = vector.load %arg2[%c136, %c0_5] : memref<544x128xf32, #tpu.memory_space<vmem>>, vector<128x128xf32>
    %cst_6 = arith.constant dense<0.000000e+00> : vector<8x128xf32>
    %10 = tpu.matmul %8, %9, %cst_6 {dimension_numbers = #tpu.dot_dimension_numbers<[1], [0], [0], [1], [0, 0, 1, 1], [], []>} : vector<8x128xf32>, vector<128x128xf32>, vector<8x128xf32> -> vector<8x128xf32>
    %c264 = arith.constant 264 : index
    %c0_7 = arith.constant 0 : index
    %11 = vector.load %arg2[%c264, %c0_7] : memref<544x128xf32, #tpu.memory_space<vmem>>, vector<1x128xf32>
    %12 = vector.broadcast %11 : vector<1x128xf32> to vector<8x128xf32>
    %13 = arith.addf %10, %12 : vector<8x128xf32>
    %c112_i32 = arith.constant 112 : i32
    %14 = tpu.dynamic_rotate %13 by %c112_i32 dim 1 : vector<8x128xf32>, i32 -> vector<8x128xf32>
    %cst_8 = arith.constant 5.000000e-01 : f32
    %15 = vector.broadcast %cst_8 : f32 to vector<8x128xf32>
    %16 = arith.mulf %15, %14 : vector<8x128xf32>
    %17 = math.exp %16 : vector<8x128xf32>
    %18 = arith.mulf %1, %17 : vector<8x128xf32>
    %19 = arith.addf %13, %18 : vector<8x128xf32>
    %c272 = arith.constant 272 : index
    %c0_9 = arith.constant 0 : index
    %20 = vector.load %arg2[%c272, %c0_9] : memref<544x128xf32, #tpu.memory_space<vmem>>, vector<128x128xf32>
    %cst_10 = arith.constant dense<0.000000e+00> : vector<8x128xf32>
    %21 = tpu.matmul %19, %20, %cst_10 {dimension_numbers = #tpu.dot_dimension_numbers<[1], [0], [0], [1], [0, 0, 1, 1], [], []>} : vector<8x128xf32>, vector<128x128xf32>, vector<8x128xf32> -> vector<8x128xf32>
    %c400 = arith.constant 400 : index
    %c0_11 = arith.constant 0 : index
    %22 = vector.load %arg2[%c400, %c0_11] : memref<544x128xf32, #tpu.memory_space<vmem>>, vector<1x128xf32>
    %23 = vector.broadcast %22 : vector<1x128xf32> to vector<8x128xf32>
    %24 = arith.addf %21, %23 : vector<8x128xf32>
    %cst_12 = arith.constant 0.000000e+00 : f32
    %25 = vector.broadcast %cst_12 : f32 to vector<8x128xf32>
    %26 = arith.maximumf %24, %25 : vector<8x128xf32>
    %c408 = arith.constant 408 : index
    %c0_13 = arith.constant 0 : index
    %27 = vector.load %arg2[%c408, %c0_13] : memref<544x128xf32, #tpu.memory_space<vmem>>, vector<128x128xf32>
    %cst_14 = arith.constant dense<0.000000e+00> : vector<8x128xf32>
    %28 = tpu.matmul %26, %27, %cst_14 {dimension_numbers = #tpu.dot_dimension_numbers<[1], [0], [0], [1], [0, 0, 1, 1], [], []>} : vector<8x128xf32>, vector<128x128xf32>, vector<8x128xf32> -> vector<8x128xf32>
    %c536 = arith.constant 536 : index
    %c0_15 = arith.constant 0 : index
    %29 = vector.load %arg2[%c536, %c0_15] : memref<544x128xf32, #tpu.memory_space<vmem>>, vector<1x128xf32>
    %30 = vector.broadcast %29 : vector<1x128xf32> to vector<8x128xf32>
    %31 = arith.addf %28, %30 : vector<8x128xf32>
    %c0_16 = arith.constant 0 : index
    %c0_17 = arith.constant 0 : index
    %32 = vector.load %arg3[%c0_16, %c0_17] : memref<8x128xf32, #tpu.memory_space<vmem>>, vector<8x128xf32>
    tpu.vector_store %arg3[%c0_16, %c0_17], %31 {strides = array<i32>} : memref<8x128xf32, #tpu.memory_space<vmem>>, vector<8x128xf32>,
    return
  }
  func.func @transform_0(%arg0: i32) -> (i32, i32) {
    %c0_i32 = arith.constant 0 : i32
    %c0_i32_0 = arith.constant 0 : i32
    return %arg0, %c0_i32 : i32, i32
  }
  func.func @transform_1(%arg0: i32) -> (i32, i32) {
    %c0_i32 = arith.constant 0 : i32
    %c0_i32_0 = arith.constant 0 : i32
    %c0_i32_1 = arith.constant 0 : i32
    return %c0_i32, %c0_i32_0 : i32, i32
  }
  func.func @transform_2(%arg0: i32) -> (i32, i32) {
    %c0_i32 = arith.constant 0 : i32
    %c0_i32_0 = arith.constant 0 : i32
    return %arg0, %c0_i32 : i32, i32
  }
}

</mosaic_0001>

<llo_original>
// kernel: tpu_custom_call.1
$region0: #{tpu_custom_call.1}
  #allocation0 [shape = 'u32[]', space=smem, size = 0x4, offset = 0x4, fixed_abs, tag = 'smem constant byte address 0x4 - core index']
  #allocation1 [shape = 'u32[144,128]{1,0:T(1,128)}', space=vmem, size = 0x12000, scoped, tag = 'internal scratch']
  %s0 = inlined_call_operand.hbm [shape: f32[8,128], index: 0, kind: input, shape index: {}]
  %s1 = inlined_call_operand.hbm [shape: f32[544,128], index: 1, kind: input, shape index: {}]
  %s2 = inlined_call_operand.hbm [shape: f32[8,128], index: 2, kind: output, shape index: {}]
  %s3 = sld [smem:[#allocation0]]
  $region26: #{tpu_custom_call.1} parent=0
    _
  %s5 = ssub.s32 1, %s3
  %s6 = scalar_select 0, %s5, %s3
  $region1: #{tpu_custom_call.1} parent=0
    #allocation2 [shape = 'u8[4096]{0}', space=vmem, size = 0x1000, scoped, tag = 'input window, operand 0, single buffered']
    #allocation3 [shape = 's32[1]{0}', space=sflag, size = 0x4, scoped, tag = 'scoped memory for tpu_custom_call.1']
    #allocation4 [shape = 's32[1]{0}', space=sflag, size = 0x4, scoped, tag = 'scoped memory for tpu_custom_call.1']
    #allocation5 [shape = 'u8[278528]{0}', space=vmem, size = 0x44000, scoped, tag = 'input window, operand 1, single buffered']
    #allocation6 [shape = 's32[1]{0}', space=sflag, size = 0x4, scoped, tag = 'scoped memory for tpu_custom_call.1']
    #allocation7 [shape = 'u8[4096]{0}', space=vmem, size = 0x1000, scoped, tag = 'output window, operand 0, single buffered']
    %7 = vsyncpa [#allocation3], 0
    %8 = vsyncpa [#allocation6], 0
    %9 = vsyncpa [#allocation4], 0
    // Predicated region
    $region2: #{tpu_custom_call.1} parent=1 // pred_check
      _
    $region3: #{tpu_custom_call.1} parent=1 // pred_check_branch
      %11 = sbr.rel (0) target = $region5
    $region4: #{tpu_custom_call.1} parent=1 // pred_region
      %s13 = ssub.s32 128, 128
      %14 = vsyncadd [#allocation3], %s13
      %s16 = sshll.u32 [#allocation2], 4
      %s17 = int_to_ptr.vmem [resolvable:$true] %s16
      %19 = dma.hbm_to_vmem [thread:$0]  %s0, 128, %s17, [#allocation3]
    $region5: #{tpu_custom_call.1} parent=1 // pred_fallthru
      _
    // Predicated region
    $region6: #{tpu_custom_call.1} parent=1 // pred_check
      _
    $region7: #{tpu_custom_call.1} parent=1 // pred_check_branch
      %21 = sbr.rel (0) target = $region9
    $region8: #{tpu_custom_call.1} parent=1 // pred_region
      %s23 = ssub.s32 8704, 8704
      %24 = vsyncadd [#allocation6], %s23
      %s25 = sshll.u32 [#allocation5], 4
      %s26 = int_to_ptr.vmem [resolvable:$true] %s25
      %31 = dma.hbm_to_vmem [thread:$0]  %s1, 8704, %s26, [#allocation6], 128, 128, 8
    $region9: #{tpu_custom_call.1} parent=1 // pred_fallthru
      _
    // Predicated region
    $region10: #{tpu_custom_call.1} parent=1 // pred_check
      _
    $region11: #{tpu_custom_call.1} parent=1 // pred_check_branch
      %33 = sbr.rel (0) target = $region13
    $region12: #{tpu_custom_call.1} parent=1 // pred_region
      %34 = dma.done [#allocation3], 128
    $region13: #{tpu_custom_call.1} parent=1 // pred_fallthru
      _
    // Predicated region
    $region14: #{tpu_custom_call.1} parent=1 // pred_check
      _
    $region15: #{tpu_custom_call.1} parent=1 // pred_check_branch
      %36 = sbr.rel (0) target = $region17
    $region16: #{tpu_custom_call.1} parent=1 // pred_region
      %37 = dma.done [#allocation6], 8704
    $region17: #{tpu_custom_call.1} parent=1 // pred_fallthru
      _
    %v38 = vld [vmem:[#allocation2] sm:$0xff]
    %39 = vrot.lane.b32.xlu0 %v38, 96
    %v40 = vpop.permute.xlu0 %39
    %v41 = vld [vmem:[#allocation5] sm:$0xff]
    %v42 = vld [vmem:[#allocation5 + $0x8] sm:$0xff]
    %v43 = vld [vmem:[#allocation5 + $0x10] sm:$0xff]
    %v44 = vld [vmem:[#allocation5 + $0x18] sm:$0xff]
    %v45 = vld [vmem:[#allocation5 + $0x20] sm:$0xff]
    %v46 = vld [vmem:[#allocation5 + $0x28] sm:$0xff]
    %v47 = vld [vmem:[#allocation5 + $0x30] sm:$0xff]
    %v48 = vld [vmem:[#allocation5 + $0x38] sm:$0xff]
    %v49 = vld [vmem:[#allocation5 + $0x40] sm:$0xff]
    %v50 = vld [vmem:[#allocation5 + $0x48] sm:$0xff]
    %v51 = vld [vmem:[#allocation5 + $0x50] sm:$0xff]
    %v52 = vld [vmem:[#allocation5 + $0x58] sm:$0xff]
    %v53 = vld [vmem:[#allocation5 + $0x60] sm:$0xff]
    %v54 = vld [vmem:[#allocation5 + $0x68] sm:$0xff]
    %v55 = vld [vmem:[#allocation5 + $0x70] sm:$0xff]
    %v56 = vld [vmem:[#allocation5 + $0x78] sm:$0xff]
    %v57 = vld [vmem:[#allocation5 + $0x80] sm:$0x1]
    %v58 = vlaneseq
    %v59 = vshrl.u32 %v58, 7
    %v60 = vsub.s32 0, %v59
    %v61 = vrot.slane %v57, %v60
    %62 = vmatprep.subr.mxu0 0.0
    %63 = vmatpush1.msra.mxu0 %v56
    %64 = vmatprep.subr.mxu0 0.0
    %65 = vmatpush1.msra.mxu0 %v55
    %66 = vmatprep.subr.mxu0 0.0
    %67 = vmatpush1.msra.mxu0 %v54
    %68 = vmatprep.subr.mxu0 0.0
    %69 = vmatpush1.msra.mxu0 %v53
    %70 = vmatprep.subr.mxu0 0.0
    %71 = vmatpush1.msra.mxu0 %v52
    %72 = vmatprep.subr.mxu0 0.0
    %73 = vmatpush1.msra.mxu0 %v51
    %74 = vmatprep.subr.mxu0 0.0
    %75 = vmatpush1.msra.mxu0 %v50
    %76 = vmatprep.subr.mxu0 0.0
    %77 = vmatpush1.msra.mxu0 %v49
    %78 = vmatprep.subr.mxu0 0.0
    %79 = vmatpush1.msra.mxu0 %v48
    %80 = vmatprep.subr.mxu0 0.0
    %81 = vmatpush1.msra.mxu0 %v47
    %82 = vmatprep.subr.mxu0 0.0
    %83 = vmatpush1.msra.mxu0 %v46
    %84 = vmatprep.subr.mxu0 0.0
    %85 = vmatpush1.msra.mxu0 %v45
    %86 = vmatprep.subr.mxu0 0.0
    %87 = vmatpush1.msra.mxu0 %v44
    %88 = vmatprep.subr.mxu0 0.0
    %89 = vmatpush1.msra.mxu0 %v43
    %90 = vmatprep.subr.mxu0 0.0
    %91 = vmatpush1.msra.mxu0 %v42
    %92 = vmatprep.subr.mxu0 0.0
    %93 = vmatpush1.msra.mxu0 %v41
    %94 = vmatprep.subr.mxu0 0.0
    %95 = vmatpush2.msra.mxu0 0.0
    %96 = vmatprep.subr.mxu0 0.0
    %97 = vmatpush2.msra.mxu0 0.0
    %98 = vmatprep.subr.mxu0 0.0
    %99 = vmatpush2.msra.mxu0 0.0
    %100 = vmatprep.subr.mxu0 0.0
    %101 = vmatpush2.msra.mxu0 0.0
    %102 = vmatprep.subr.mxu0 0.0
    %103 = vmatpush2.msra.mxu0 0.0
    %104 = vmatprep.subr.mxu0 0.0
    %105 = vmatpush2.msra.mxu0 0.0
    %106 = vmatprep.subr.mxu0 0.0
    %107 = vmatpush2.msra.mxu0 0.0
    %108 = vmatprep.subr.mxu0 0.0
    %109 = vmatpush2.msra.mxu0 0.0
    %110 = vmatprep.subr.mxu0 0.0
    %111 = vmatpush2.msra.mxu0 0.0
    %112 = vmatprep.subr.mxu0 0.0
    %113 = vmatpush2.msra.mxu0 0.0
    %114 = vmatprep.subr.mxu0 0.0
    %115 = vmatpush2.msra.mxu0 0.0
    %116 = vmatprep.subr.mxu0 0.0
    %117 = vmatpush2.msra.mxu0 0.0
    %118 = vmatprep.subr.mxu0 0.0
    %119 = vmatpush2.msra.mxu0 0.0
    %120 = vmatprep.subr.mxu0 0.0
    %121 = vmatpush2.msra.mxu0 0.0
    %122 = vmatprep.subr.mxu0 0.0
    %123 = vmatpush2.msra.mxu0 0.0
    %124 = vmatprep.subr.mxu0 0.0
    %125 = vmatpush2.msra.mxu0 0.0
    %126 = vmatprep.mubr.f32.mxu0 0.0
    %127 = vmatmul.mubr.f32.gmra.mxu0 %v38
    %v128 = vpop.f32.mrf.mxu0
    %v129 = vadd.f32 %v61, %v128
    %v130 = vpop.f32.mrf.mxu0
    %131 = vdwg.mxu0
    %v132 = vmax.f32 %v129, 0.0
    %v133 = vld [vmem:[#allocation5 + $0x88] sm:$0xff]
    %v134 = vld [vmem:[#allocation5 + $0x90] sm:$0xff]
    %v135 = vld [vmem:[#allocation5 + $0x98] sm:$0xff]
    %v136 = vld [vmem:[#allocation5 + $0xa0] sm:$0xff]
    %v137 = vld [vmem:[#allocation5 + $0xa8] sm:$0xff]
    %v138 = vld [vmem:[#allocation5 + $0xb0] sm:$0xff]
    %v139 = vld [vmem:[#allocation5 + $0xb8] sm:$0xff]
    %v140 = vld [vmem:[#allocation5 + $0xc0] sm:$0xff]
    %v141 = vld [vmem:[#allocation5 + $0xc8] sm:$0xff]
    %v142 = vld [vmem:[#allocation5 + $0xd0] sm:$0xff]
    %v143 = vld [vmem:[#allocation5 + $0xd8] sm:$0xff]
    %v144 = vld [vmem:[#allocation5 + $0xe0] sm:$0xff]
    %v145 = vld [vmem:[#allocation5 + $0xe8] sm:$0xff]
    %v146 = vld [vmem:[#allocation5 + $0xf0] sm:$0xff]
    %v147 = vld [vmem:[#allocation5 + $0xf8] sm:$0xff]
    %v148 = vld [vmem:[#allocation5 + $0x100] sm:$0xff]
    %v149 = vld [vmem:[#allocation5 + $0x108] sm:$0x1]
    %v150 = vlaneseq
    %v151 = vshrl.u32 %v150, 7
    %v152 = vsub.s32 0, %v151
    %v153 = vrot.slane %v149, %v152
    %154 = vmatprep.subr.mxu0 0.0
    %155 = vmatpush1.msra.mxu0 %v148
    %156 = vmatprep.subr.mxu0 0.0
    %157 = vmatpush1.msra.mxu0 %v147
    %158 = vmatprep.subr.mxu0 0.0
    %159 = vmatpush1.msra.mxu0 %v146
    %160 = vmatprep.subr.mxu0 0.0
    %161 = vmatpush1.msra.mxu0 %v145
    %162 = vmatprep.subr.mxu0 0.0
    %163 = vmatpush1.msra.mxu0 %v144
    %164 = vmatprep.subr.mxu0 0.0
    %165 = vmatpush1.msra.mxu0 %v143
    %166 = vmatprep.subr.mxu0 0.0
    %167 = vmatpush1.msra.mxu0 %v142
    %168 = vmatprep.subr.mxu0 0.0
    %169 = vmatpush1.msra.mxu0 %v141
    %170 = vmatprep.subr.mxu0 0.0
    %171 = vmatpush1.msra.mxu0 %v140
    %172 = vmatprep.subr.mxu0 0.0
    %173 = vmatpush1.msra.mxu0 %v139
    %174 = vmatprep.subr.mxu0 0.0
    %175 = vmatpush1.msra.mxu0 %v138
    %176 = vmatprep.subr.mxu0 0.0
    %177 = vmatpush1.msra.mxu0 %v137
    %178 = vmatprep.subr.mxu0 0.0
    %179 = vmatpush1.msra.mxu0 %v136
    %180 = vmatprep.subr.mxu0 0.0
    %181 = vmatpush1.msra.mxu0 %v135
    %182 = vmatprep.subr.mxu0 0.0
    %183 = vmatpush1.msra.mxu0 %v134
    %184 = vmatprep.subr.mxu0 0.0
    %185 = vmatpush1.msra.mxu0 %v133
    %186 = vmatprep.subr.mxu0 0.0
    %187 = vmatpush2.msra.mxu0 0.0
    %188 = vmatprep.subr.mxu0 0.0
    %189 = vmatpush2.msra.mxu0 0.0
    %190 = vmatprep.subr.mxu0 0.0
    %191 = vmatpush2.msra.mxu0 0.0
    %192 = vmatprep.subr.mxu0 0.0
    %193 = vmatpush2.msra.mxu0 0.0
    %194 = vmatprep.subr.mxu0 0.0
    %195 = vmatpush2.msra.mxu0 0.0
    %196 = vmatprep.subr.mxu0 0.0
    %197 = vmatpush2.msra.mxu0 0.0
    %198 = vmatprep.subr.mxu0 0.0
    %199 = vmatpush2.msra.mxu0 0.0
    %200 = vmatprep.subr.mxu0 0.0
    %201 = vmatpush2.msra.mxu0 0.0
    %202 = vmatprep.subr.mxu0 0.0
    %203 = vmatpush2.msra.mxu0 0.0
    %204 = vmatprep.subr.mxu0 0.0
    %205 = vmatpush2.msra.mxu0 0.0
    %206 = vmatprep.subr.mxu0 0.0
    %207 = vmatpush2.msra.mxu0 0.0
    %208 = vmatprep.subr.mxu0 0.0
    %209 = vmatpush2.msra.mxu0 0.0
    %210 = vmatprep.subr.mxu0 0.0
    %211 = vmatpush2.msra.mxu0 0.0
    %212 = vmatprep.subr.mxu0 0.0
    %213 = vmatpush2.msra.mxu0 0.0
    %214 = vmatprep.subr.mxu0 0.0
    %215 = vmatpush2.msra.mxu0 0.0
    %216 = vmatprep.subr.mxu0 0.0
    %217 = vmatpush2.msra.mxu0 0.0
    %218 = vmatprep.mubr.f32.mxu0 0.0
    %219 = vmatmul.mubr.f32.gmra.mxu0 %v132
    %v220 = vpop.f32.mrf.mxu0
    %v221 = vadd.f32 %v153, %v220
    %v222 = vpop.f32.mrf.mxu0
    %223 = vdwg.mxu0
    %224 = vrot.lane.b32.xlu0 %v221, 112
    %v225 = vpop.permute.xlu0 %224
    %v226 = vmul.f32 %v225, 0.5
    %v227 = vmul.f32 %v226, 1.442695
    %v228 = vpow.pop %v227
    %v229 = vmul.f32 %v40, %v228
    %v230 = vadd.f32 %v221, %v229
    %v231 = vld [vmem:[#allocation5 + $0x110] sm:$0xff]
    %v232 = vld [vmem:[#allocation5 + $0x118] sm:$0xff]
    %v233 = vld [vmem:[#allocation5 + $0x120] sm:$0xff]
    %v234 = vld [vmem:[#allocation5 + $0x128] sm:$0xff]
    %v235 = vld [vmem:[#allocation5 + $0x130] sm:$0xff]
    %v236 = vld [vmem:[#allocation5 + $0x138] sm:$0xff]
    %v237 = vld [vmem:[#allocation5 + $0x140] sm:$0xff]
    %v238 = vld [vmem:[#allocation5 + $0x148] sm:$0xff]
    %v239 = vld [vmem:[#allocation5 + $0x150] sm:$0xff]
    %v240 = vld [vmem:[#allocation5 + $0x158] sm:$0xff]
    %v241 = vld [vmem:[#allocation5 + $0x160] sm:$0xff]
    %v242 = vld [vmem:[#allocation5 + $0x168] sm:$0xff]
    %v243 = vld [vmem:[#allocation5 + $0x170] sm:$0xff]
    %v244 = vld [vmem:[#allocation5 + $0x178] sm:$0xff]
    %v245 = vld [vmem:[#allocation5 + $0x180] sm:$0xff]
    %v246 = vld [vmem:[#allocation5 + $0x188] sm:$0xff]
    %v247 = vld [vmem:[#allocation5 + $0x190] sm:$0x1]
    %v248 = vlaneseq
    %v249 = vshrl.u32 %v248, 7
    %v250 = vsub.s32 0, %v249
    %v251 = vrot.slane %v247, %v250
    %252 = vmatprep.subr.mxu0 0.0
    %253 = vmatpush1.msra.mxu0 %v246
    %254 = vmatprep.subr.mxu0 0.0
    %255 = vmatpush1.msra.mxu0 %v245
    %256 = vmatprep.subr.mxu0 0.0
    %257 = vmatpush1.msra.mxu0 %v244
    %258 = vmatprep.subr.mxu0 0.0
    %259 = vmatpush1.msra.mxu0 %v243
    %260 = vmatprep.subr.mxu0 0.0
    %261 = vmatpush1.msra.mxu0 %v242
    %262 = vmatprep.subr.mxu0 0.0
    %263 = vmatpush1.msra.mxu0 %v241
    %264 = vmatprep.subr.mxu0 0.0
    %265 = vmatpush1.msra.mxu0 %v240
    %266 = vmatprep.subr.mxu0 0.0
    %267 = vmatpush1.msra.mxu0 %v239
    %268 = vmatprep.subr.mxu0 0.0
    %269 = vmatpush1.msra.mxu0 %v238
    %270 = vmatprep.subr.mxu0 0.0
    %271 = vmatpush1.msra.mxu0 %v237
    %272 = vmatprep.subr.mxu0 0.0
    %273 = vmatpush1.msra.mxu0 %v236
    %274 = vmatprep.subr.mxu0 0.0
    %275 = vmatpush1.msra.mxu0 %v235
    %276 = vmatprep.subr.mxu0 0.0
    %277 = vmatpush1.msra.mxu0 %v234
    %278 = vmatprep.subr.mxu0 0.0
    %279 = vmatpush1.msra.mxu0 %v233
    %280 = vmatprep.subr.mxu0 0.0
    %281 = vmatpush1.msra.mxu0 %v232
    %282 = vmatprep.subr.mxu0 0.0
    %283 = vmatpush1.msra.mxu0 %v231
    %284 = vmatprep.subr.mxu0 0.0
    %285 = vmatpush2.msra.mxu0 0.0
    %286 = vmatprep.subr.mxu0 0.0
    %287 = vmatpush2.msra.mxu0 0.0
    %288 = vmatprep.subr.mxu0 0.0
    %289 = vmatpush2.msra.mxu0 0.0
    %290 = vmatprep.subr.mxu0 0.0
    %291 = vmatpush2.msra.mxu0 0.0
    %292 = vmatprep.subr.mxu0 0.0
    %293 = vmatpush2.msra.mxu0 0.0
    %294 = vmatprep.subr.mxu0 0.0
    %295 = vmatpush2.msra.mxu0 0.0
    %296 = vmatprep.subr.mxu0 0.0
    %297 = vmatpush2.msra.mxu0 0.0
    %298 = vmatprep.subr.mxu0 0.0
    %299 = vmatpush2.msra.mxu0 0.0
    %300 = vmatprep.subr.mxu0 0.0
    %301 = vmatpush2.msra.mxu0 0.0
    %302 = vmatprep.subr.mxu0 0.0
    %303 = vmatpush2.msra.mxu0 0.0
    %304 = vmatprep.subr.mxu0 0.0
    %305 = vmatpush2.msra.mxu0 0.0
    %306 = vmatprep.subr.mxu0 0.0
    %307 = vmatpush2.msra.mxu0 0.0
    %308 = vmatprep.subr.mxu0 0.0
    %309 = vmatpush2.msra.mxu0 0.0
    %310 = vmatprep.subr.mxu0 0.0
    %311 = vmatpush2.msra.mxu0 0.0
    %312 = vmatprep.subr.mxu0 0.0
    %313 = vmatpush2.msra.mxu0 0.0
    %314 = vmatprep.subr.mxu0 0.0
    %315 = vmatpush2.msra.mxu0 0.0
    %316 = vmatprep.mubr.f32.mxu0 0.0
    %317 = vmatmul.mubr.f32.gmra.mxu0 %v230
    %v318 = vpop.f32.mrf.mxu0
    %v319 = vadd.f32 %v251, %v318
    %v320 = vpop.f32.mrf.mxu0
    %321 = vdwg.mxu0
    %v322 = vmax.f32 %v319, 0.0
    %v323 = vld [vmem:[#allocation5 + $0x198] sm:$0xff]
    %v324 = vld [vmem:[#allocation5 + $0x1a0] sm:$0xff]
    %v325 = vld [vmem:[#allocation5 + $0x1a8] sm:$0xff]
    %v326 = vld [vmem:[#allocation5 + $0x1b0] sm:$0xff]
    %v327 = vld [vmem:[#allocation5 + $0x1b8] sm:$0xff]
    %v328 = vld [vmem:[#allocation5 + $0x1c0] sm:$0xff]
    %v329 = vld [vmem:[#allocation5 + $0x1c8] sm:$0xff]
    %v330 = vld [vmem:[#allocation5 + $0x1d0] sm:$0xff]
    %v331 = vld [vmem:[#allocation5 + $0x1d8] sm:$0xff]
    %v332 = vld [vmem:[#allocation5 + $0x1e0] sm:$0xff]
    %v333 = vld [vmem:[#allocation5 + $0x1e8] sm:$0xff]
    %v334 = vld [vmem:[#allocation5 + $0x1f0] sm:$0xff]
    %v335 = vld [vmem:[#allocation5 + $0x1f8] sm:$0xff]
    %v336 = vld [vmem:[#allocation5 + $0x200] sm:$0xff]
    %v337 = vld [vmem:[#allocation5 + $0x208] sm:$0xff]
    %v338 = vld [vmem:[#allocation5 + $0x210] sm:$0xff]
    %v339 = vld [vmem:[#allocation5 + $0x218] sm:$0x1]
    %v340 = vlaneseq
    %v341 = vshrl.u32 %v340, 7
    %v342 = vsub.s32 0, %v341
    %v343 = vrot.slane %v339, %v342
    %344 = vmatprep.subr.mxu0 0.0
    %345 = vmatpush1.msra.mxu0 %v338
    %346 = vmatprep.subr.mxu0 0.0
    %347 = vmatpush1.msra.mxu0 %v337
    %348 = vmatprep.subr.mxu0 0.0
    %349 = vmatpush1.msra.mxu0 %v336
    %350 = vmatprep.subr.mxu0 0.0
    %351 = vmatpush1.msra.mxu0 %v335
    %352 = vmatprep.subr.mxu0 0.0
    %353 = vmatpush1.msra.mxu0 %v334
    %354 = vmatprep.subr.mxu0 0.0
    %355 = vmatpush1.msra.mxu0 %v333
    %356 = vmatprep.subr.mxu0 0.0
    %357 = vmatpush1.msra.mxu0 %v332
    %358 = vmatprep.subr.mxu0 0.0
    %359 = vmatpush1.msra.mxu0 %v331
    %360 = vmatprep.subr.mxu0 0.0
    %361 = vmatpush1.msra.mxu0 %v330
    %362 = vmatprep.subr.mxu0 0.0
    %363 = vmatpush1.msra.mxu0 %v329
    %364 = vmatprep.subr.mxu0 0.0
    %365 = vmatpush1.msra.mxu0 %v328
    %366 = vmatprep.subr.mxu0 0.0
    %367 = vmatpush1.msra.mxu0 %v327
    %368 = vmatprep.subr.mxu0 0.0
    %369 = vmatpush1.msra.mxu0 %v326
    %370 = vmatprep.subr.mxu0 0.0
    %371 = vmatpush1.msra.mxu0 %v325
    %372 = vmatprep.subr.mxu0 0.0
    %373 = vmatpush1.msra.mxu0 %v324
    %374 = vmatprep.subr.mxu0 0.0
    %375 = vmatpush1.msra.mxu0 %v323
    %376 = vmatprep.subr.mxu0 0.0
    %377 = vmatpush2.msra.mxu0 0.0
    %378 = vmatprep.subr.mxu0 0.0
    %379 = vmatpush2.msra.mxu0 0.0
    %380 = vmatprep.subr.mxu0 0.0
    %381 = vmatpush2.msra.mxu0 0.0
    %382 = vmatprep.subr.mxu0 0.0
    %383 = vmatpush2.msra.mxu0 0.0
    %384 = vmatprep.subr.mxu0 0.0
    %385 = vmatpush2.msra.mxu0 0.0
    %386 = vmatprep.subr.mxu0 0.0
    %387 = vmatpush2.msra.mxu0 0.0
    %388 = vmatprep.subr.mxu0 0.0
    %389 = vmatpush2.msra.mxu0 0.0
    %390 = vmatprep.subr.mxu0 0.0
    %391 = vmatpush2.msra.mxu0 0.0
    %392 = vmatprep.subr.mxu0 0.0
    %393 = vmatpush2.msra.mxu0 0.0
    %394 = vmatprep.subr.mxu0 0.0
    %395 = vmatpush2.msra.mxu0 0.0
    %396 = vmatprep.subr.mxu0 0.0
    %397 = vmatpush2.msra.mxu0 0.0
    %398 = vmatprep.subr.mxu0 0.0
    %399 = vmatpush2.msra.mxu0 0.0
    %400 = vmatprep.subr.mxu0 0.0
    %401 = vmatpush2.msra.mxu0 0.0
    %402 = vmatprep.subr.mxu0 0.0
    %403 = vmatpush2.msra.mxu0 0.0
    %404 = vmatprep.subr.mxu0 0.0
    %405 = vmatpush2.msra.mxu0 0.0
    %406 = vmatprep.subr.mxu0 0.0
    %407 = vmatpush2.msra.mxu0 0.0
    %408 = vmatprep.mubr.f32.mxu0 0.0
    %409 = vmatmul.mubr.f32.gmra.mxu0 %v322
    %v410 = vpop.f32.mrf.mxu0
    %v411 = vadd.f32 %v343, %v410
    %v412 = vpop.f32.mrf.mxu0
    %413 = vdwg.mxu0
    %414 = vst [vmem:[#allocation7] sm:$0xff] %v411
    // Predicated region
    $region18: #{tpu_custom_call.1} parent=1 // pred_check
      _
    $region19: #{tpu_custom_call.1} parent=1 // pred_check_branch
      %416 = sbr.rel (0) target = $region21
    $region20: #{tpu_custom_call.1} parent=1 // pred_region
      %s418 = ssub.s32 128, 128
      %419 = vsyncadd [#allocation4], %s418
      %s421 = sshll.u32 [#allocation7], 4
      %s422 = int_to_ptr.vmem [resolvable:$true] %s421
      %424 = dma.vmem_to_hbm [thread:$0]  %s422, 128, %s2, [#allocation4]
    $region21: #{tpu_custom_call.1} parent=1 // pred_fallthru
      _
    // Predicated region
    $region22: #{tpu_custom_call.1} parent=1 // pred_check
      _
    $region23: #{tpu_custom_call.1} parent=1 // pred_check_branch
      %426 = sbr.rel (0) target = $region25
    $region24: #{tpu_custom_call.1} parent=1 // pred_region
      %427 = dma.done [#allocation4], 128
    $region25: #{tpu_custom_call.1} parent=1 // pred_fallthru
      _
    %428 = vsyncpa [#allocation3], 1
    %429 = vsyncpa [#allocation6], 1
    %430 = vsyncpa [#allocation4], 1

</llo_original>
